<compile_context>
chip_gen: v7x
topology: tpu7x:2x2x1
jax: 0.10.0
libtpu: 0.0.40
codegen_flags: <defaults>
</compile_context>

<pallas_src>
import functools
import math

import jax
import jax.numpy as jnp
import numpy as np
from jax.experimental import pallas as pl
from jax.experimental.pallas import tpu as pltpu


def _round_up(x, m):
    return (x + m - 1) // m * m


def _pick_row_tile(ho, wo, cout_pad):
    """Output rows per grid step.  Targets an MXU M dim (TM = th*wo) of
    256..1024 while keeping the f32 accumulator (TM*Cout_pad*4B) modest, and
    keeps TM a multiple of 8 so the output block tiles cleanly."""
    target_tm = min(1024, max(256, (4 << 20) // max(1, cout_pad * 4)))
    th = max(1, min(ho, target_tm // max(1, wo)))
    step = 8 // math.gcd(wo, 8)          # smallest granule with th*wo % 8 == 0
    th = max(step, (th // step) * step)
    return th


def _conv2d_rowfold_kernel(x_ref, w_ref, b_ref, o_ref, *,
                           kh, th, wo, stride, cg_pad, use_relu):
    """One grid step == (one batch image) x (one tile of TH output rows).

    x_ref : (Hp, Wo, CG_pad)      Kw-folded, zero-padded rows (bf16, VMEM);
                                  CG_pad = round_up(Kw*Cin, 128) -> all loads
                                  are full 128-aligned lane groups.
    w_ref : (Kh*CG_pad, Cout_pad) weight slab, row i*CG_pad + j*Cin + c (bf16).
    b_ref : (1, Cout_pad)         bias (f32).
    o_ref : (TM, Cout_pad)        lane-dense output tile, TM = TH*Wo.
    """
    t = pl.program_id(1)
    tm = th * wo
    row_step = th * stride
    row_base = t * row_step
    if row_step % 8 == 0:
        row_base = pl.multiple_of(row_base, 8)

    # Kh lane-dense chunks of the contraction, accumulated in f32.  No im2col
    # scratch: each chunk is loaded, reshaped (leading-dim merge only) and fed
    # straight to the MXU, so chunk i+1's loads overlap chunk i's matmul.
    acc = None
    for i in range(kh):
        if stride == 1:
            rows = x_ref[pl.ds(row_base + i, th), :, :]
        else:
            # TODO(synk): confirm Mosaic lowers the strided row slice without a
            # gather-style copy for stride > 1 (the test exercises stride=1).
            rows = x_ref[pl.ds(row_base + i, th, stride=stride), :, :]
        a = rows.reshape(tm, cg_pad)
        part = jnp.dot(a, w_ref[i * cg_pad:(i + 1) * cg_pad, :],
                       preferred_element_type=jnp.float32)
        acc = part if acc is None else acc + part

    # Fused epilogue (no accumulator-scratch round trip), then one lane-dense
    # store of the full (TM, Cout_pad) tile.
    y = acc + b_ref[...]
    if use_relu:
        y = jnp.maximum(y, 0.0)
    o_ref[...] = y.astype(o_ref.dtype)


def conv2d_pallas(x_nchw, weight_oihw, bias, *, stride=1, padding=0,
                  use_relu=True, compute_dtype=jnp.bfloat16, out_dtype=None):
    """Conv2d (+ optional ReLU) matching torch.nn.Conv2d semantics.

    x_nchw      : (N, Cin, H, W)
    weight_oihw : (Cout, Cin, Kh, Kw)   (PyTorch layout)
    bias        : (Cout,)
    returns     : (N, Cout, Ho, Wo) in `out_dtype` (default: x dtype).
    Compute uses bf16 operands with f32 MXU accumulation (gate via
    compute_dtype=jnp.float32 for strict f32 parity).
    """
    n, cin, h, w = x_nchw.shape
    cout, _, kh, kw = weight_oihw.shape
    ho = (h + 2 * padding - kh) // stride + 1
    wo = (w + 2 * padding - kw) // stride + 1
    out_dtype = x_nchw.dtype if out_dtype is None else out_dtype

    cin_g = kw * cin                       # Kw folded into channels
    cg_pad = _round_up(cin_g, 128)         # 128-aligned lane group per Kh tap
    k_pad = kh * cg_pad                    # contraction depth (mult. of 128)
    cout_pad = 128 if cout <= 128 else _round_up(cout, 256)

    th = _pick_row_tile(ho, wo, cout_pad)
    ho_pad = _round_up(ho, th)             # tolerate non-divisible Ho
    tm = th * wo
    grid = (n, ho_pad // th)

    # ---- wrapper: layout plumbing only (transpose / slice / pad, no FLOPs) --
    x_nhwc = jnp.transpose(x_nchw, (0, 2, 3, 1)).astype(compute_dtype)
    x_sp = jnp.pad(x_nhwc, ((0, 0), (padding, padding),
                            (padding, padding), (0, 0)))
    # Fold the Kw taps into channels: x_fold[n,h,wout, j*Cin+c] =
    # x_sp[n, h, wout*stride + j, c].  Pure layout; stride along W applied here.
    cols = [x_sp[:, :, j:j + (wo - 1) * stride + 1:stride, :]
            for j in range(kw)]
    x_fold = jnp.concatenate(cols, axis=-1)
    x_fold = jnp.pad(x_fold, ((0, 0), (0, 0), (0, 0), (0, cg_pad - cin_g)))
    hp_need = (ho_pad - 1) * stride + kh
    if x_fold.shape[1] < hp_need:
        x_fold = jnp.pad(x_fold, ((0, 0), (0, hp_need - x_fold.shape[1]),
                                  (0, 0), (0, 0)))
    else:
        x_fold = x_fold[:, :hp_need]

    # Weight slab: row index i*CG_pad + j*Cin + c  <->  weight[o, c, i, j].
    w_khkwio = jnp.transpose(weight_oihw, (2, 3, 1, 0)).astype(compute_dtype)
    w_grp = w_khkwio.reshape(kh, kw * cin, cout)
    w_grp = jnp.pad(w_grp, ((0, 0), (0, cg_pad - cin_g), (0, cout_pad - cout)))
    w2d = w_grp.reshape(k_pad, cout_pad)

    b2d = jnp.pad(bias.astype(jnp.float32),
                  (0, cout_pad - cout)).reshape(1, cout_pad)

    kernel = functools.partial(
        _conv2d_rowfold_kernel, kh=kh, th=th, wo=wo, stride=stride,
        cg_pad=cg_pad, use_relu=use_relu)

    # VMEM budget: blocks are double-buffered; leave ~50% headroom, cap for v7x.
    in_item = jnp.dtype(compute_dtype).itemsize
    out_item = jnp.dtype(out_dtype).itemsize
    x_block = hp_need * wo * cg_pad * in_item
    w_block = k_pad * cout_pad * in_item
    b_block = cout_pad * 4
    o_block = tm * cout_pad * out_item
    acc_bytes = tm * cout_pad * 4
    need = 2 * (x_block + w_block + b_block + o_block) + acc_bytes
    vmem_limit = int(min(56 << 20, max(8 << 20, int(need * 1.5))))

    cost = pl.CostEstimate(
        flops=2 * n * ho * wo * kh * kw * cin * cout,
        transcendentals=0,
        bytes_accessed=int(x_fold.size * in_item + w2d.size * in_item
                           + b2d.size * 4
                           + n * ho_pad * wo * cout_pad * out_item))

    # Batch across cores when N >= 2 (row tiles reuse the same image block and
    # would re-DMA it if split across cores); row tiles parallel only for N==1.
    dim_sem = ("parallel", "arbitrary") if n > 1 else ("arbitrary", "parallel")

    out_flat = pl.pallas_call(
        kernel,
        out_shape=jax.ShapeDtypeStruct((n, ho_pad * wo, cout_pad), out_dtype),
        grid_spec=pltpu.PrefetchScalarGridSpec(
            num_scalar_prefetch=0,
            grid=grid,
            in_specs=[
                pl.BlockSpec((None, hp_need, wo, cg_pad),
                             lambda b, t: (b, 0, 0, 0)),
                pl.BlockSpec((k_pad, cout_pad), lambda b, t: (0, 0)),
                pl.BlockSpec((1, cout_pad), lambda b, t: (0, 0)),
            ],
            out_specs=pl.BlockSpec((None, tm, cout_pad),
                                   lambda b, t: (b, t, 0)),
        ),
        compiler_params=pltpu.CompilerParams(
            dimension_semantics=dim_sem,
            vmem_limit_bytes=vmem_limit,
        ),
        cost_estimate=cost,
    )(x_fold, w2d, b2d)

    out_nhwc = out_flat[:, :ho * wo, :cout].reshape(n, ho, wo, cout)
    return jnp.transpose(out_nhwc, (0, 3, 1, 2))  # back to NCHW


class ConvNdPallas:
    """JAX/Pallas equivalent of the PyTorch `_ConvNd` module (2-D variant)."""

    def __init__(self, in_channels, out_channels, kernel_size, stride=1,
                 padding=0, build_activation=True, key=None):
        key = jax.random.PRNGKey(0) if key is None else key
        kw_, kb_ = jax.random.split(key)
        fan_in = in_channels * kernel_size * kernel_size
        bound = 1.0 / np.sqrt(fan_in)  # PyTorch Conv default init range
        self.weight = jax.random.uniform(
            kw_, (out_channels, in_channels, kernel_size, kernel_size),
            dtype=jnp.float32, minval=-bound, maxval=bound)
        self.bias = jax.random.uniform(
            kb_, (out_channels,), dtype=jnp.float32, minval=-bound,
            maxval=bound)
        self.stride = stride
        self.padding = padding
        self.use_relu = bool(build_activation)

    def __call__(self, x_nchw):
        return conv2d_pallas(x_nchw, self.weight, self.bias,
                             stride=self.stride, padding=self.padding,
                             use_relu=self.use_relu)


if __name__ == "__main__":
    key = jax.random.PRNGKey(0)
    kx, kp = jax.random.split(key)

    # Small shapes consistent with the module: batch=2, C_in=4, H=W=16.
    x = jax.random.normal(kx, (2, 4, 16, 16), dtype=jnp.float32)

    module = ConvNdPallas(in_channels=4, out_channels=8, kernel_size=3,
                          stride=1, padding=1, build_activation=True, key=kp)

    out = module(x)
    out = jax.block_until_ready(out)

    # Reference with the same bf16 operand rounding the kernel applies
    # (accumulation is f32 in both paths).
    xb = x.astype(jnp.bfloat16).astype(jnp.float32)
    wb = module.weight.astype(jnp.bfloat16).astype(jnp.float32)
    ref = jax.lax.conv_general_dilated(
        xb, wb, window_strides=(1, 1), padding=((1, 1), (1, 1)),
        dimension_numbers=("NCHW", "OIHW", "NCHW"))
    ref = ref + module.bias.reshape(1, -1, 1, 1)
    ref = jnp.maximum(ref, 0.0)

    assert out.shape == (2, 8, 16, 16)
    assert jnp.allclose(out, ref, atol=1e-2, rtol=1e-2)

    print("KERNEL_OK")
</pallas_src>

<mosaic_0001>
module attributes {stable_mosaic.version = 11 : i64} {
  func.func @_conv2d_rowfold_kernel(%arg0: i32, %arg1: i32, %arg2: memref<1x18x16x128xbf16, #tpu.memory_space<vmem>>, %arg3: memref<384x128xbf16, #tpu.memory_space<vmem>>, %arg4: memref<1x128xf32, #tpu.memory_space<vmem>>, %arg5: memref<1x256x128xf32, #tpu.memory_space<vmem>>) attributes {dimension_semantics = [#tpu.dimension_semantics<parallel>, #tpu.dimension_semantics<arbitrary>], iteration_bounds = array<i64: 2, 1>, scalar_prefetch = 0 : i64, scratch_operands = 0 : i64, tpu.core_type = #tpu.core_type<tc>, window_params = [{transform_indices = @transform_0, window_bounds = array<i64: 1, 18, 16, 128>}, {pipeline_mode = #tpu.pipeline_mode<synchronous>, transform_indices = @transform_1, window_bounds = array<i64: 384, 128>}, {pipeline_mode = #tpu.pipeline_mode<synchronous>, transform_indices = @transform_2, window_bounds = array<i64: 1, 128>}, {transform_indices = @transform_3, window_bounds = array<i64: 1, 256, 128>}]} {
    %c16_i32 = arith.constant 16 : i32
    %0 = arith.muli %arg1, %c16_i32 : i32
    %1 = tpu.assume_multiple %0, 8 : i32
    %c0_i32 = arith.constant 0 : i32
    %2 = arith.addi %1, %c0_i32 : i32
    %c0 = arith.constant 0 : index
    %3 = arith.index_cast %2 : i32 to index
    %c0_0 = arith.constant 0 : index
    %c0_1 = arith.constant 0 : index
    %4 = vector.load %arg2[%c0, %3, %c0_0, %c0_1] : memref<1x18x16x128xbf16, #tpu.memory_space<vmem>>, vector<1x16x16x128xbf16>
    %5 = vector.shape_cast %4 : vector<1x16x16x128xbf16> to vector<16x16x128xbf16>
    %6 = vector.shape_cast %5 : vector<16x16x128xbf16> to vector<256x128xbf16>
    %c0_2 = arith.constant 0 : index
    %c0_3 = arith.constant 0 : index
    %7 = vector.load %arg3[%c0_2, %c0_3] : memref<384x128xbf16, #tpu.memory_space<vmem>>, vector<128x128xbf16>
    %cst = arith.constant dense<0.000000e+00> : vector<256x128xf32>
    %8 = tpu.matmul %6, %7, %cst {dimension_numbers = #tpu.dot_dimension_numbers<[1], [0], [0], [1], [0, 0, 1, 1], [], []>} : vector<256x128xbf16>, vector<128x128xbf16>, vector<256x128xf32> -> vector<256x128xf32>
    %c1_i32 = arith.constant 1 : i32
    %9 = arith.addi %1, %c1_i32 : i32
    %c0_4 = arith.constant 0 : index
    %10 = arith.index_cast %9 : i32 to index
    %c0_5 = arith.constant 0 : index
    %c0_6 = arith.constant 0 : index
    %11 = vector.load %arg2[%c0_4, %10, %c0_5, %c0_6] : memref<1x18x16x128xbf16, #tpu.memory_space<vmem>>, vector<1x16x16x128xbf16>
    %12 = vector.shape_cast %11 : vector<1x16x16x128xbf16> to vector<16x16x128xbf16>
    %13 = vector.shape_cast %12 : vector<16x16x128xbf16> to vector<256x128xbf16>
    %c128 = arith.constant 128 : index
    %c0_7 = arith.constant 0 : index
    %14 = vector.load %arg3[%c128, %c0_7] : memref<384x128xbf16, #tpu.memory_space<vmem>>, vector<128x128xbf16>
    %cst_8 = arith.constant dense<0.000000e+00> : vector<256x128xf32>
    %15 = tpu.matmul %13, %14, %cst_8 {dimension_numbers = #tpu.dot_dimension_numbers<[1], [0], [0], [1], [0, 0, 1, 1], [], []>} : vector<256x128xbf16>, vector<128x128xbf16>, vector<256x128xf32> -> vector<256x128xf32>
    %16 = arith.addf %8, %15 : vector<256x128xf32>
    %c2_i32 = arith.constant 2 : i32
    %17 = arith.addi %1, %c2_i32 : i32
    %c0_9 = arith.constant 0 : index
    %18 = arith.index_cast %17 : i32 to index
    %c0_10 = arith.constant 0 : index
    %c0_11 = arith.constant 0 : index
    %19 = vector.load %arg2[%c0_9, %18, %c0_10, %c0_11] : memref<1x18x16x128xbf16, #tpu.memory_space<vmem>>, vector<1x16x16x128xbf16>
    %20 = vector.shape_cast %19 : vector<1x16x16x128xbf16> to vector<16x16x128xbf16>
    %21 = vector.shape_cast %20 : vector<16x16x128xbf16> to vector<256x128xbf16>
    %c256 = arith.constant 256 : index
    %c0_12 = arith.constant 0 : index
    %22 = vector.load %arg3[%c256, %c0_12] : memref<384x128xbf16, #tpu.memory_space<vmem>>, vector<128x128xbf16>
    %cst_13 = arith.constant dense<0.000000e+00> : vector<256x128xf32>
    %23 = tpu.matmul %21, %22, %cst_13 {dimension_numbers = #tpu.dot_dimension_numbers<[1], [0], [0], [1], [0, 0, 1, 1], [], []>} : vector<256x128xbf16>, vector<128x128xbf16>, vector<256x128xf32> -> vector<256x128xf32>
    %24 = arith.addf %16, %23 : vector<256x128xf32>
    %c0_14 = arith.constant 0 : index
    %c0_15 = arith.constant 0 : index
    %25 = vector.load %arg4[%c0_14, %c0_15] : memref<1x128xf32, #tpu.memory_space<vmem>>, vector<1x128xf32>
    %26 = vector.broadcast %25 : vector<1x128xf32> to vector<256x128xf32>
    %27 = arith.addf %24, %26 : vector<256x128xf32>
    %cst_16 = arith.constant 0.000000e+00 : f32
    %28 = vector.broadcast %cst_16 : f32 to vector<256x128xf32>
    %29 = arith.maximumf %27, %28 : vector<256x128xf32>
    %c0_17 = arith.constant 0 : index
    %c0_18 = arith.constant 0 : index
    %c0_19 = arith.constant 0 : index
    %30 = vector.load %arg5[%c0_17, %c0_18, %c0_19] : memref<1x256x128xf32, #tpu.memory_space<vmem>>, vector<1x256x128xf32>
    %31 = vector.shape_cast %30 : vector<1x256x128xf32> to vector<256x128xf32>
    %32 = vector.shape_cast %29 : vector<256x128xf32> to vector<1x256x128xf32>
    tpu.vector_store %arg5[%c0_17, %c0_18, %c0_19], %32 {strides = array<i32>} : memref<1x256x128xf32, #tpu.memory_space<vmem>>, vector<1x256x128xf32>,
    return
  }
  func.func @transform_0(%arg0: i32, %arg1: i32) -> (i32, i32, i32, i32) {
    %c0_i32 = arith.constant 0 : i32
    %c0_i32_0 = arith.constant 0 : i32
    %c0_i32_1 = arith.constant 0 : i32
    %c0_i32_2 = arith.constant 0 : i32
    return %arg0, %c0_i32, %c0_i32_0, %c0_i32_1 : i32, i32, i32, i32
  }
  func.func @transform_1(%arg0: i32, %arg1: i32) -> (i32, i32) {
    %c0_i32 = arith.constant 0 : i32
    %c0_i32_0 = arith.constant 0 : i32
    %c0_i32_1 = arith.constant 0 : i32
    return %c0_i32, %c0_i32_0 : i32, i32
  }
  func.func @transform_2(%arg0: i32, %arg1: i32) -> (i32, i32) {
    %c0_i32 = arith.constant 0 : i32
    %c0_i32_0 = arith.constant 0 : i32
    %c0_i32_1 = arith.constant 0 : i32
    return %c0_i32, %c0_i32_0 : i32, i32
  }
  func.func @transform_3(%arg0: i32, %arg1: i32) -> (i32, i32, i32) {
    %c0_i32 = arith.constant 0 : i32
    %c0_i32_0 = arith.constant 0 : i32
    return %arg0, %arg1, %c0_i32 : i32, i32, i32
  }
}

</mosaic_0001>

<llo_original>
// kernel: tpu_custom_call.1
$region0: #{tpu_custom_call.1}
  #allocation0 [shape = 'u32[]', space=smem, size = 0x4, offset = 0x4, fixed_abs, tag = 'smem constant byte address 0x4 - core index']
  #allocation1 [shape = 'u32[144,128]{1,0:T(1,128)}', space=vmem, size = 0x12000, scoped, tag = 'internal scratch']
  %s0 = inlined_call_operand.hbm [shape: bf16[2,18,16,128], index: 0, kind: input, shape index: {}]
  %s1 = inlined_call_operand.hbm [shape: bf16[384,128], index: 1, kind: input, shape index: {}]
  %s2 = inlined_call_operand.vmem [shape: f32[1,128], index: 2, kind: input, shape index: {}]
  %s3 = inlined_call_operand.hbm [shape: f32[2,256,128], index: 3, kind: output, shape index: {}]
  %s4 = sld [smem:[#allocation0]]
  $region53: #{tpu_custom_call.1} parent=0
    _
  %s6 = ssub.s32 1, %s4
  %s7 = scalar_select 0, %s6, %s4
  $region1: #{tpu_custom_call.1} parent=0
    #allocation2 [shape = 'u8[147456]{0}', space=vmem, size = 0x24000, scoped, tag = 'input window, operand 0']
    #allocation3 [shape = 's32[2]{0}', space=sflag, size = 0x8, scoped, tag = 'scoped memory for tpu_custom_call.1']
    #allocation4 [shape = 's32[2]{0}', space=sflag, size = 0x8, scoped, tag = 'scoped memory for tpu_custom_call.1']
    #allocation5 [shape = 'u8[98304]{0}', space=vmem, size = 0x18000, scoped, tag = 'input window, operand 1, single buffered']
    #allocation6 [shape = 's32[1]{0}', space=sflag, size = 0x4, scoped, tag = 'scoped memory for tpu_custom_call.1']
    #allocation7 [shape = 'u8[262144]{0}', space=vmem, size = 0x40000, scoped, tag = 'output window, operand 0']
    %8 = vsyncpa [#allocation3], 0
    %s9 = scalar_lea.sflag [#allocation3], 1
    %10 = vsyncpa %s9, 0
    %11 = vsyncpa [#allocation6], 0
    %12 = vsyncpa [#allocation4], 0
    %s13 = scalar_lea.sflag [#allocation4], 1
    %14 = vsyncpa %s13, 0
    loop: start=0, step=1, limit=4
    $region2: #{tpu_custom_call.1} parent=1 // loop_pre_header
      _
    $region3: #{tpu_custom_call.1} parent=1 // loop_header
      %s16 = sphi 0, %s20
      %p17 = scmp.ge.s32.totalorder %s16, 4
      %s23 = sphi 0, %s35
      %s24 = sphi 0, %s31
      %s25 = sphi 0, %s23
      %s26 = sphi 0, %s24
      %s27 = sphi 0, %s25
      %s28 = sphi 0, %s26
      %s38 = sphi 0, %s40
      %s41 = sphi 0, %s38
      %s42 = sphi 0, %s41
      %s58 = sphi 0, %s42
      %s62 = sphi 0, %s62
      %s64 = sphi 0, %s62
      %s65 = sphi 0, %s64
      %s79 = sphi 0, %s65
      %s83 = sphi 0, %s83
      %s85 = sphi 0, %s83
      %s86 = sphi 0, %s85
      %s100 = sphi 0, %s86
      %s108 = sphi 0, %s110
      %s111 = sphi 0, %s108
      %s112 = sphi 0, %s111
      %s128 = sphi 0, %s112
    $region4: #{tpu_custom_call.1} parent=1 // loop_header_branch
      %19 = sbr.rel (%p17) target = $region8
    $region5: #{tpu_custom_call.1} parent=1 // loop_body
      %s21 = ssub.s32 %s16, 1
      %s22 = ssub.s32 %s16, 2
      %s29 = sadd.s32 1, %s24
      %p30 = scmp.ge.s32.totalorder %s29, 1
      %s31 = scalar_select %p30, 0, %s29
      %s32 = sadd.s32 1, %s23
      %s33 = scalar_select %p30, %s32, %s23
      %p34 = scmp.ge.s32.totalorder %s33, 2
      %s35 = scalar_select %p34, 0, %s33
      %s36 = ssub.s32 %s23, %s35
      %p37 = scmp.eq.s32.totalorder %s36, 0
      %s39 = sadd.s32 %s38, 1
      %s40 = scalar_select %p37, %s38, %s39
      %p43 = pneg %p37
      %p44 = scmp.eq.s32.totalorder %s16, 1
      %p45 = por %p43, %p44
      %p46 = scmp.ne.s32.totalorder %s38, %s41
      %p47 = scmp.eq.s32.totalorder %s16, 0
      %p48 = por %p46, %p47
      %p49 = scmp.ne.s32.totalorder %s38, %s41
      %p50 = scmp.eq.s32.totalorder %s21, 1
      %p51 = por %p49, %p50
      %p52 = scmp.ne.s32.totalorder %s41, %s42
      %p53 = scmp.eq.s32.totalorder %s21, 0
      %p54 = por %p52, %p53
      %p55 = scmp.ne.s32.totalorder %s41, %s42
      %p56 = scmp.eq.s32.totalorder %s22, 1
      %p57 = por %p55, %p56
      %p59 = scmp.ne.s32.totalorder %s42, %s58
      %p60 = scmp.eq.s32.totalorder %s22, 0
      %p61 = por %p59, %p60
      %s63 = sadd.s32 %s62, 1
      %p66 = scmp.eq.s32.totalorder %s16, 1
      %p67 = scmp.ne.s32.totalorder %s62, %s64
      %p68 = scmp.eq.s32.totalorder %s16, 0
      %p69 = por %p67, %p68
      %p70 = scmp.ne.s32.totalorder %s62, %s64
      %p71 = scmp.eq.s32.totalorder %s21, 1
      %p72 = por %p70, %p71
      %p73 = scmp.ne.s32.totalorder %s64, %s65
      %p74 = scmp.eq.s32.totalorder %s21, 0
      %p75 = por %p73, %p74
      %p76 = scmp.ne.s32.totalorder %s64, %s65
      %p77 = scmp.eq.s32.totalorder %s22, 1
      %p78 = por %p76, %p77
      %p80 = scmp.ne.s32.totalorder %s65, %s79
      %p81 = scmp.eq.s32.totalorder %s22, 0
      %p82 = por %p80, %p81
      %s84 = sadd.s32 %s83, 1
      %p87 = scmp.eq.s32.totalorder %s16, 1
      %p88 = scmp.ne.s32.totalorder %s83, %s85
      %p89 = scmp.eq.s32.totalorder %s16, 0
      %p90 = por %p88, %p89
      %p91 = scmp.ne.s32.totalorder %s83, %s85
      %p92 = scmp.eq.s32.totalorder %s21, 1
      %p93 = por %p91, %p92
      %p94 = scmp.ne.s32.totalorder %s85, %s86
      %p95 = scmp.eq.s32.totalorder %s21, 0
      %p96 = por %p94, %p95
      %p97 = scmp.ne.s32.totalorder %s85, %s86
      %p98 = scmp.eq.s32.totalorder %s22, 1
      %p99 = por %p97, %p98
      %p101 = scmp.ne.s32.totalorder %s86, %s100
      %p102 = scmp.eq.s32.totalorder %s22, 0
      %p103 = por %p101, %p102
      %s104 = ssub.s32 %s23, %s35
      %s105 = ssub.s32 %s24, %s31
      %s106 = sor.u32 %s104, %s105
      %p107 = scmp.eq.s32.totalorder %s106, 0
      %s109 = sadd.s32 %s108, 1
      %s110 = scalar_select %p107, %s108, %s109
      %p113 = pneg %p107
      %p114 = scmp.eq.s32.totalorder %s16, 1
      %p115 = por %p113, %p114
      %p116 = scmp.ne.s32.totalorder %s108, %s111
      %p117 = scmp.eq.s32.totalorder %s16, 0
      %p118 = por %p116, %p117
      %p119 = scmp.ne.s32.totalorder %s108, %s111
      %p120 = scmp.eq.s32.totalorder %s21, 1
      %p121 = por %p119, %p120
      %p122 = scmp.ne.s32.totalorder %s111, %s112
      %p123 = scmp.eq.s32.totalorder %s21, 0
      %p124 = por %p122, %p123
      %p125 = scmp.ne.s32.totalorder %s111, %s112
      %p126 = scmp.eq.s32.totalorder %s22, 1
      %p127 = por %p125, %p126
      %p129 = scmp.ne.s32.totalorder %s112, %s128
      %p130 = scmp.eq.s32.totalorder %s22, 0
      %p131 = por %p129, %p130
      %p132 = scmp.le.s32.totalorder 1, %s16
      %p133 = scmp.lt.s32.totalorder %s16, 3
      %p134 = pnand %p132, %p133
      %p135 = pneg %p134
      // Predicated region
      $region9: #{tpu_custom_call.1} parent=5 // pred_check
        _
      $region10: #{tpu_custom_call.1} parent=5 // pred_check_branch
        %137 = sbr.rel (%p134) target = $region12
      $region11: #{tpu_custom_call.1} parent=5 // pred_region
        %s138 = ssub.s32 %s16, 1
        // Predicated region
        $region13: #{tpu_custom_call.1} parent=11 // pred_check
          %p139 = pneg %p75
        $region14: #{tpu_custom_call.1} parent=11 // pred_check_branch
          %141 = sbr.rel (%p139) target = $region16
        $region15: #{tpu_custom_call.1} parent=11 // pred_region
          %s143 = ssub.s32 3072, 3072
          %144 = vsyncadd [#allocation6], %s143
          %s145 = sshll.u32 [#allocation5], 4
          %s146 = int_to_ptr.vmem [resolvable:$true] %s145
          %151 = dma.hbm_to_vmem [thread:$0]  %s1, 3072, %s146, [#allocation6], 64, 64, 4
        $region16: #{tpu_custom_call.1} parent=11 // pred_fallthru
          _
        // Predicated region
        $region17: #{tpu_custom_call.1} parent=11 // pred_check
          %p152 = pneg %p96
        $region18: #{tpu_custom_call.1} parent=11 // pred_check_branch
          %154 = sbr.rel (%p152) target = $region20
        $region19: #{tpu_custom_call.1} parent=11 // pred_region
          _
        $region20: #{tpu_custom_call.1} parent=11 // pred_fallthru
          _
      $region12: #{tpu_custom_call.1} parent=5 // pred_fallthru
        _
      %p155 = scmp.lt.s32.totalorder %s16, 2
      // Predicated region
      $region21: #{tpu_custom_call.1} parent=5 // pred_check
        %p156 = pneg %p155
      $region22: #{tpu_custom_call.1} parent=5 // pred_check_branch
        %158 = sbr.rel (%p156) target = $region24
      $region23: #{tpu_custom_call.1} parent=5 // pred_region
        // Predicated region
        $region25: #{tpu_custom_call.1} parent=23 // pred_check
          %p159 = pneg %p48
        $region26: #{tpu_custom_call.1} parent=23 // pred_check_branch
          %161 = sbr.rel (%p159) target = $region28
        $region27: #{tpu_custom_call.1} parent=23 // pred_region
          %s162 = sand.u32 %s38, 1
          %s163 = scalar_lea.sflag [#allocation3], %s162
          %s164 = sand.u32 %s38, 1
          %s165 = smul.addr %s164, 144
          %s166 = scalar_lea.vmem [#allocation2], %s165
          %s168 = ssub.s32 2304, 2304
          %169 = vsyncadd %s163, %s168
          %s170 = smul.addr %s23, 36
          %s171 = smul.addr %s170, 64
          %s172 = scalar_lea.hbm %s0, %s171
          %s173 = sshll.u32 %s166, 4
          %s174 = int_to_ptr.vmem [resolvable:$true] %s173
          %179 = dma.hbm_to_vmem [thread:$0]  %s172, 2304, %s174, %s163, 64, 64, 4
        $region28: #{tpu_custom_call.1} parent=23 // pred_fallthru
          _
      $region24: #{tpu_custom_call.1} parent=5 // pred_fallthru
        _
      %p180 = scmp.le.s32.totalorder 1, %s16
      %p181 = scmp.lt.s32.totalorder %s16, 3
      %p182 = pnand %p180, %p181
      %p183 = pneg %p182
      // Predicated region
      $region29: #{tpu_custom_call.1} parent=5 // pred_check
        _
      $region30: #{tpu_custom_call.1} parent=5 // pred_check_branch
        %185 = sbr.rel (%p182) target = $region32
      $region31: #{tpu_custom_call.1} parent=5 // pred_region
        %s186 = ssub.s32 %s16, 1
        %s187 = sand.u32 %s41, 1
        %s188 = scalar_lea.sflag [#allocation3], %s187
        %s189 = sand.u32 %s41, 1
        %s190 = smul.addr %s189, 144
        %s191 = scalar_lea.vmem [#allocation2], %s190
        // Predicated region
        $region33: #{tpu_custom_call.1} parent=31 // pred_check
          %p192 = pneg %p54
        $region34: #{tpu_custom_call.1} parent=31 // pred_check_branch
          %194 = sbr.rel (%p192) target = $region36
        $region35: #{tpu_custom_call.1} parent=31 // pred_region
          %195 = dma.done %s188, 2304
        $region36: #{tpu_custom_call.1} parent=31 // pred_fallthru
          _
        // Predicated region
        $region37: #{tpu_custom_call.1} parent=31 // pred_check
          %p196 = pneg %p75
        $region38: #{tpu_custom_call.1} parent=31 // pred_check_branch
          %198 = sbr.rel (%p196) target = $region40
        $region39: #{tpu_custom_call.1} parent=31 // pred_region
          %199 = dma.done [#allocation6], 3072
        $region40: #{tpu_custom_call.1} parent=31 // pred_fallthru
          _
        %s200 = sand.u32 %s41, 1
        %s201 = scalar_lea.sflag [#allocation3], %s200
        %s202 = sand.u32 %s41, 1
        %s203 = smul.addr %s202, 144
        %s204 = scalar_lea.vmem [#allocation2], %s203
        %p205 = pneg %p54
        %p206 = pneg %p51
        %p207 = pneg %p75
        %p208 = pneg %p72
        %p209 = pneg %p96
        %p210 = pneg %p93
        %p211 = pneg %p124
        %p212 = pneg %p121
        %s213 = sand.u32 %s111, 1
        %s214 = scalar_lea.sflag [#allocation4], %s213
        %s215 = sand.u32 %s111, 1
        %s216 = smul.addr %s215, 256
        %s217 = scalar_lea.vmem [#allocation7], %s216
        %s218 = smul.u32 32, %s26
        %s220 = smul.u32 %s26, 16
        %s221 = smul.u32 %s220, 2
        %s222 = smul.addr %s221, 4
        %s223 = scalar_lea.vmem %s191, %s222 [#allocation2]
        %v224 = vld [vmem:[%s223] sm:$0xf]
        %v225 = vld [vmem:[%s223 + $0x4] sm:$0xf]
        %v226 = vld [vmem:[%s223 + $0x8] sm:$0xf]
        %v227 = vld [vmem:[%s223 + $0xc] sm:$0xf]
        %v228 = vld [vmem:[%s223 + $0x10] sm:$0xf]
        %v229 = vld [vmem:[%s223 + $0x14] sm:$0xf]
        %v230 = vld [vmem:[%s223 + $0x18] sm:$0xf]
        %v231 = vld [vmem:[%s223 + $0x1c] sm:$0xf]
        %v232 = vld [vmem:[%s223 + $0x20] sm:$0xf]
        %v233 = vld [vmem:[%s223 + $0x24] sm:$0xf]
        %v234 = vld [vmem:[%s223 + $0x28] sm:$0xf]
        %v235 = vld [vmem:[%s223 + $0x2c] sm:$0xf]
        %v236 = vld [vmem:[%s223 + $0x30] sm:$0xf]
        %v237 = vld [vmem:[%s223 + $0x34] sm:$0xf]
        %v238 = vld [vmem:[%s223 + $0x38] sm:$0xf]
        %v239 = vld [vmem:[%s223 + $0x3c] sm:$0xf]
        %v240 = vld [vmem:[%s223 + $0x40] sm:$0xf]
        %v241 = vld [vmem:[%s223 + $0x44] sm:$0xf]
        %v242 = vld [vmem:[%s223 + $0x48] sm:$0xf]
        %v243 = vld [vmem:[%s223 + $0x4c] sm:$0xf]
        %v244 = vld [vmem:[%s223 + $0x50] sm:$0xf]
        %v245 = vld [vmem:[%s223 + $0x54] sm:$0xf]
        %v246 = vld [vmem:[%s223 + $0x58] sm:$0xf]
        %v247 = vld [vmem:[%s223 + $0x5c] sm:$0xf]
        %v248 = vld [vmem:[%s223 + $0x60] sm:$0xf]
        %v249 = vld [vmem:[%s223 + $0x64] sm:$0xf]
        %v250 = vld [vmem:[%s223 + $0x68] sm:$0xf]
        %v251 = vld [vmem:[%s223 + $0x6c] sm:$0xf]
        %v252 = vld [vmem:[%s223 + $0x70] sm:$0xf]
        %v253 = vld [vmem:[%s223 + $0x74] sm:$0xf]
        %v254 = vld [vmem:[%s223 + $0x78] sm:$0xf]
        %v255 = vld [vmem:[%s223 + $0x7c] sm:$0xf]
        %v256 = vld [vmem:[#allocation5] sm:$0xf]
        %v257 = vld [vmem:[#allocation5 + $0x4] sm:$0xf]
        %v258 = vld [vmem:[#allocation5 + $0x8] sm:$0xf]
        %v259 = vld [vmem:[#allocation5 + $0xc] sm:$0xf]
        %v260 = vld [vmem:[#allocation5 + $0x10] sm:$0xf]
        %v261 = vld [vmem:[#allocation5 + $0x14] sm:$0xf]
        %v262 = vld [vmem:[#allocation5 + $0x18] sm:$0xf]
        %v263 = vld [vmem:[#allocation5 + $0x1c] sm:$0xf]
        %v264 = vld [vmem:[#allocation5 + $0x20] sm:$0xf]
        %v265 = vld [vmem:[#allocation5 + $0x24] sm:$0xf]
        %v266 = vld [vmem:[#allocation5 + $0x28] sm:$0xf]
        %v267 = vld [vmem:[#allocation5 + $0x2c] sm:$0xf]
        %v268 = vld [vmem:[#allocation5 + $0x30] sm:$0xf]
        %v269 = vld [vmem:[#allocation5 + $0x34] sm:$0xf]
        %v270 = vld [vmem:[#allocation5 + $0x38] sm:$0xf]
        %v271 = vld [vmem:[#allocation5 + $0x3c] sm:$0xf]
        %s272 = sadd.s32 %s220, 1
        %s273 = smul.u32 %s272, 2
        %s274 = smul.addr %s273, 4
        %s275 = scalar_lea.vmem %s191, %s274 [#allocation2]
        %v276 = vld [vmem:[%s275] sm:$0xf]
        %v277 = vld [vmem:[%s275 + $0x4] sm:$0xf]
        %v278 = vld [vmem:[%s275 + $0x8] sm:$0xf]
        %v279 = vld [vmem:[%s275 + $0xc] sm:$0xf]
        %v280 = vld [vmem:[%s275 + $0x10] sm:$0xf]
        %v281 = vld [vmem:[%s275 + $0x14] sm:$0xf]
        %v282 = vld [vmem:[%s275 + $0x18] sm:$0xf]
        %v283 = vld [vmem:[%s275 + $0x1c] sm:$0xf]
        %v284 = vld [vmem:[%s275 + $0x20] sm:$0xf]
        %v285 = vld [vmem:[%s275 + $0x24] sm:$0xf]
        %v286 = vld [vmem:[%s275 + $0x28] sm:$0xf]
        %v287 = vld [vmem:[%s275 + $0x2c] sm:$0xf]
        %v288 = vld [vmem:[%s275 + $0x30] sm:$0xf]
        %v289 = vld [vmem:[%s275 + $0x34] sm:$0xf]
        %v290 = vld [vmem:[%s275 + $0x38] sm:$0xf]
        %v291 = vld [vmem:[%s275 + $0x3c] sm:$0xf]
        %v292 = vld [vmem:[%s275 + $0x40] sm:$0xf]
        %v293 = vld [vmem:[%s275 + $0x44] sm:$0xf]
        %v294 = vld [vmem:[%s275 + $0x48] sm:$0xf]
        %v295 = vld [vmem:[%s275 + $0x4c] sm:$0xf]
        %v296 = vld [vmem:[%s275 + $0x50] sm:$0xf]
        %v297 = vld [vmem:[%s275 + $0x54] sm:$0xf]
        %v298 = vld [vmem:[%s275 + $0x58] sm:$0xf]
        %v299 = vld [vmem:[%s275 + $0x5c] sm:$0xf]
        %v300 = vld [vmem:[%s275 + $0x60] sm:$0xf]
        %v301 = vld [vmem:[%s275 + $0x64] sm:$0xf]
        %v302 = vld [vmem:[%s275 + $0x68] sm:$0xf]
        %v303 = vld [vmem:[%s275 + $0x6c] sm:$0xf]
        %v304 = vld [vmem:[%s275 + $0x70] sm:$0xf]
        %v305 = vld [vmem:[%s275 + $0x74] sm:$0xf]
        %v306 = vld [vmem:[%s275 + $0x78] sm:$0xf]
        %v307 = vld [vmem:[%s275 + $0x7c] sm:$0xf]
        %v308 = vld [vmem:[#allocation5 + $0x40] sm:$0xf]
        %v309 = vld [vmem:[#allocation5 + $0x44] sm:$0xf]
        %v310 = vld [vmem:[#allocation5 + $0x48] sm:$0xf]
        %v311 = vld [vmem:[#allocation5 + $0x4c] sm:$0xf]
        %v312 = vld [vmem:[#allocation5 + $0x50] sm:$0xf]
        %v313 = vld [vmem:[#allocation5 + $0x54] sm:$0xf]
        %v314 = vld [vmem:[#allocation5 + $0x58] sm:$0xf]
        %v315 = vld [vmem:[#allocation5 + $0x5c] sm:$0xf]
        %v316 = vld [vmem:[#allocation5 + $0x60] sm:$0xf]
        %v317 = vld [vmem:[#allocation5 + $0x64] sm:$0xf]
        %v318 = vld [vmem:[#allocation5 + $0x68] sm:$0xf]
        %v319 = vld [vmem:[#allocation5 + $0x6c] sm:$0xf]
        %v320 = vld [vmem:[#allocation5 + $0x70] sm:$0xf]
        %v321 = vld [vmem:[#allocation5 + $0x74] sm:$0xf]
        %v322 = vld [vmem:[#allocation5 + $0x78] sm:$0xf]
        %v323 = vld [vmem:[#allocation5 + $0x7c] sm:$0xf]
        %v356 = vunpack.c.l.b16 %v276
        %v357 = vunpack.c.l.b16 %v277
        %v358 = vunpack.c.l.b16 %v278
        %v359 = vunpack.c.l.b16 %v279
        %v360 = vunpack.c.l.b16 %v280
        %v361 = vunpack.c.l.b16 %v281
        %v362 = vunpack.c.l.b16 %v282
        %v363 = vunpack.c.l.b16 %v283
        %v364 = vunpack.c.l.b16 %v284
        %v365 = vunpack.c.l.b16 %v285
        %v366 = vunpack.c.l.b16 %v286
        %v367 = vunpack.c.l.b16 %v287
        %v368 = vunpack.c.l.b16 %v288
        %v369 = vunpack.c.l.b16 %v289
        %v370 = vunpack.c.l.b16 %v290
        %v371 = vunpack.c.l.b16 %v291
        %v372 = vunpack.c.l.b16 %v292
        %v373 = vunpack.c.l.b16 %v293
        %v374 = vunpack.c.l.b16 %v294
        %v375 = vunpack.c.l.b16 %v295
        %v376 = vunpack.c.l.b16 %v296
        %v377 = vunpack.c.l.b16 %v297
        %v378 = vunpack.c.l.b16 %v298
        %v379 = vunpack.c.l.b16 %v299
        %v380 = vunpack.c.l.b16 %v300
        %v381 = vunpack.c.l.b16 %v301
        %v382 = vunpack.c.l.b16 %v302
        %v383 = vunpack.c.l.b16 %v303
        %v384 = vunpack.c.l.b16 %v304
        %v385 = vunpack.c.l.b16 %v305
        %v386 = vunpack.c.l.b16 %v306
        %v387 = vunpack.c.l.b16 %v307
        %v388 = vpack.c.b16 %v357, %v356
        %v389 = vpack.c.b16 %v359, %v358
        %v390 = vpack.c.b16 %v361, %v360
        %v391 = vpack.c.b16 %v363, %v362
        %v392 = vpack.c.b16 %v365, %v364
        %v393 = vpack.c.b16 %v367, %v366
        %v394 = vpack.c.b16 %v369, %v368
        %v395 = vpack.c.b16 %v371, %v370
        %v396 = vpack.c.b16 %v373, %v372
        %v397 = vpack.c.b16 %v375, %v374
        %v398 = vpack.c.b16 %v377, %v376
        %v399 = vpack.c.b16 %v379, %v378
        %v400 = vpack.c.b16 %v381, %v380
        %v401 = vpack.c.b16 %v383, %v382
        %v402 = vpack.c.b16 %v385, %v384
        %v403 = vpack.c.b16 %v387, %v386
        %v436 = vunpack.c.l.b16 %v308
        %v437 = vunpack.c.l.b16 %v309
        %v438 = vunpack.c.l.b16 %v310
        %v439 = vunpack.c.l.b16 %v311
        %v440 = vunpack.c.l.b16 %v312
        %v441 = vunpack.c.l.b16 %v313
        %v442 = vunpack.c.l.b16 %v314
        %v443 = vunpack.c.l.b16 %v315
        %v444 = vunpack.c.l.b16 %v316
        %v445 = vunpack.c.l.b16 %v317
        %v446 = vunpack.c.l.b16 %v318
        %v447 = vunpack.c.l.b16 %v319
        %v448 = vunpack.c.l.b16 %v320
        %v449 = vunpack.c.l.b16 %v321
        %v450 = vunpack.c.l.b16 %v322
        %v451 = vunpack.c.l.b16 %v323
        %v452 = vpack.c.b16 %v437, %v436
        %v453 = vpack.c.b16 %v439, %v438
        %v454 = vpack.c.b16 %v441, %v440
        %v455 = vpack.c.b16 %v443, %v442
        %v456 = vpack.c.b16 %v445, %v444
        %v457 = vpack.c.b16 %v447, %v446
        %v458 = vpack.c.b16 %v449, %v448
        %v459 = vpack.c.b16 %v451, %v450
        %468 = vmatprep.subr.bf16.mxu0 0
        %469 = vmatpush1.bf16.msra.mxu0 %v452
        %470 = vmatprep.subr.bf16.mxu0 0
        %471 = vmatpush1.bf16.msra.mxu0 %v453
        %472 = vmatprep.subr.bf16.mxu0 0
        %473 = vmatpush1.bf16.msra.mxu0 %v454
        %474 = vmatprep.subr.bf16.mxu0 0
        %475 = vmatpush1.bf16.msra.mxu0 %v455
        %476 = vmatprep.subr.bf16.mxu0 0
        %477 = vmatpush1.bf16.msra.mxu0 %v456
        %478 = vmatprep.subr.bf16.mxu0 0
        %479 = vmatpush1.bf16.msra.mxu0 %v457
        %480 = vmatprep.subr.bf16.mxu0 0
        %481 = vmatpush1.bf16.msra.mxu0 %v458
        %482 = vmatprep.subr.bf16.mxu0 0
        %483 = vmatpush1.bf16.msra.mxu0 %v459
        %484 = vmatprep.subr.bf16.mxu0 0
        %485 = vmatpush1.bf16.msra.mxu0 0
        %486 = vmatprep.subr.bf16.mxu0 0
        %487 = vmatpush1.bf16.msra.mxu0 0
        %488 = vmatprep.subr.bf16.mxu0 0
        %489 = vmatpush1.bf16.msra.mxu0 0
        %490 = vmatprep.subr.bf16.mxu0 0
        %491 = vmatpush1.bf16.msra.mxu0 0
        %492 = vmatprep.subr.bf16.mxu0 0
        %493 = vmatpush1.bf16.msra.mxu0 0
        %494 = vmatprep.subr.bf16.mxu0 0
        %495 = vmatpush1.bf16.msra.mxu0 0
        %496 = vmatprep.subr.bf16.mxu0 0
        %497 = vmatpush1.bf16.msra.mxu0 0
        %498 = vmatprep.subr.bf16.mxu0 0
        %499 = vmatpush1.bf16.msra.mxu0 0
        %500 = vmatprep.mubr.bf16.mxu0 0
        %501 = vmatmul.mubr.bf16.gmra.mrb[0].mxu0 %v388
        %v502 = vpop.f32.mrb[0].mxu0
        %v503 = vadd.f32 0.0, %v502
        %v504 = vpop.f32.mrb[0].mxu0
        %v505 = vpop.f32.mrb[0].mxu0
        %v506 = vadd.f32 0.0, %v505
        %v507 = vpop.f32.mrb[0].mxu0
        %508 = vmatprep.mubr.bf16.mxu0 0
        %509 = vmatmul.mubr.bf16.gmra.mrb[0].mxu0 %v389
        %v510 = vpop.f32.mrb[0].mxu0
        %v511 = vadd.f32 0.0, %v510
        %v512 = vpop.f32.mrb[0].mxu0
        %v513 = vpop.f32.mrb[0].mxu0
        %v514 = vadd.f32 0.0, %v513
        %v515 = vpop.f32.mrb[0].mxu0
        %516 = vmatprep.mubr.bf16.mxu0 0
        %517 = vmatmul.mubr.bf16.gmra.mrb[0].mxu0 %v390
        %v518 = vpop.f32.mrb[0].mxu0
        %v519 = vadd.f32 0.0, %v518
        %v520 = vpop.f32.mrb[0].mxu0
        %v521 = vpop.f32.mrb[0].mxu0
        %v522 = vadd.f32 0.0, %v521
        %v523 = vpop.f32.mrb[0].mxu0
        %524 = vmatprep.mubr.bf16.mxu0 0
        %525 = vmatmul.mubr.bf16.gmra.mrb[0].mxu0 %v391
        %v526 = vpop.f32.mrb[0].mxu0
        %v527 = vadd.f32 0.0, %v526
        %v528 = vpop.f32.mrb[0].mxu0
        %v529 = vpop.f32.mrb[0].mxu0
        %v530 = vadd.f32 0.0, %v529
        %v531 = vpop.f32.mrb[0].mxu0
        %532 = vmatprep.mubr.bf16.mxu0 0
        %533 = vmatmul.mubr.bf16.gmra.mrb[0].mxu0 %v392
        %v534 = vpop.f32.mrb[0].mxu0
        %v535 = vadd.f32 0.0, %v534
        %v536 = vpop.f32.mrb[0].mxu0
        %v537 = vpop.f32.mrb[0].mxu0
        %v538 = vadd.f32 0.0, %v537
        %v539 = vpop.f32.mrb[0].mxu0
        %540 = vmatprep.mubr.bf16.mxu0 0
        %541 = vmatmul.mubr.bf16.gmra.mrb[0].mxu0 %v393
        %v542 = vpop.f32.mrb[0].mxu0
        %v543 = vadd.f32 0.0, %v542
        %v544 = vpop.f32.mrb[0].mxu0
        %v545 = vpop.f32.mrb[0].mxu0
        %v546 = vadd.f32 0.0, %v545
        %v547 = vpop.f32.mrb[0].mxu0
        %548 = vmatprep.mubr.bf16.mxu0 0
        %549 = vmatmul.mubr.bf16.gmra.mrb[0].mxu0 %v394
        %v550 = vpop.f32.mrb[0].mxu0
        %v551 = vadd.f32 0.0, %v550
        %v552 = vpop.f32.mrb[0].mxu0
        %v553 = vpop.f32.mrb[0].mxu0
        %v554 = vadd.f32 0.0, %v553
        %v555 = vpop.f32.mrb[0].mxu0
        %556 = vmatprep.mubr.bf16.mxu0 0
        %557 = vmatmul.mubr.bf16.gmra.mrb[0].mxu0 %v395
        %v558 = vpop.f32.mrb[0].mxu0
        %v559 = vadd.f32 0.0, %v558
        %v560 = vpop.f32.mrb[0].mxu0
        %v561 = vpop.f32.mrb[0].mxu0
        %v562 = vadd.f32 0.0, %v561
        %v563 = vpop.f32.mrb[0].mxu0
        %564 = vmatprep.mubr.bf16.mxu0 0
        %565 = vmatmul.mubr.bf16.gmra.mrb[0].mxu0 %v396
        %v566 = vpop.f32.mrb[0].mxu0
        %v567 = vadd.f32 0.0, %v566
        %v568 = vpop.f32.mrb[0].mxu0
        %v569 = vpop.f32.mrb[0].mxu0
        %v570 = vadd.f32 0.0, %v569
        %v571 = vpop.f32.mrb[0].mxu0
        %572 = vmatprep.mubr.bf16.mxu0 0
        %573 = vmatmul.mubr.bf16.gmra.mrb[0].mxu0 %v397
        %v574 = vpop.f32.mrb[0].mxu0
        %v575 = vadd.f32 0.0, %v574
        %v576 = vpop.f32.mrb[0].mxu0
        %v577 = vpop.f32.mrb[0].mxu0
        %v578 = vadd.f32 0.0, %v577
        %v579 = vpop.f32.mrb[0].mxu0
        %580 = vmatprep.mubr.bf16.mxu0 0
        %581 = vmatmul.mubr.bf16.gmra.mrb[0].mxu0 %v398
        %v582 = vpop.f32.mrb[0].mxu0
        %v583 = vadd.f32 0.0, %v582
        %v584 = vpop.f32.mrb[0].mxu0
        %v585 = vpop.f32.mrb[0].mxu0
        %v586 = vadd.f32 0.0, %v585
        %v587 = vpop.f32.mrb[0].mxu0
        %588 = vmatprep.mubr.bf16.mxu0 0
        %589 = vmatmul.mubr.bf16.gmra.mrb[0].mxu0 %v399
        %v590 = vpop.f32.mrb[0].mxu0
        %v591 = vadd.f32 0.0, %v590
        %v592 = vpop.f32.mrb[0].mxu0
        %v593 = vpop.f32.mrb[0].mxu0
        %v594 = vadd.f32 0.0, %v593
        %v595 = vpop.f32.mrb[0].mxu0
        %596 = vmatprep.mubr.bf16.mxu0 0
        %597 = vmatmul.mubr.bf16.gmra.mrb[0].mxu0 %v400
        %v598 = vpop.f32.mrb[0].mxu0
        %v599 = vadd.f32 0.0, %v598
        %v600 = vpop.f32.mrb[0].mxu0
        %v601 = vpop.f32.mrb[0].mxu0
        %v602 = vadd.f32 0.0, %v601
        %v603 = vpop.f32.mrb[0].mxu0
        %604 = vmatprep.mubr.bf16.mxu0 0
        %605 = vmatmul.mubr.bf16.gmra.mrb[0].mxu0 %v401
        %v606 = vpop.f32.mrb[0].mxu0
        %v607 = vadd.f32 0.0, %v606
        %v608 = vpop.f32.mrb[0].mxu0
        %v609 = vpop.f32.mrb[0].mxu0
        %v610 = vadd.f32 0.0, %v609
        %v611 = vpop.f32.mrb[0].mxu0
        %612 = vmatprep.mubr.bf16.mxu0 0
        %613 = vmatmul.mubr.bf16.gmra.mrb[0].mxu0 %v402
        %v614 = vpop.f32.mrb[0].mxu0
        %v615 = vadd.f32 0.0, %v614
        %v616 = vpop.f32.mrb[0].mxu0
        %v617 = vpop.f32.mrb[0].mxu0
        %v618 = vadd.f32 0.0, %v617
        %v619 = vpop.f32.mrb[0].mxu0
        %620 = vmatprep.mubr.bf16.mxu0 0
        %621 = vmatmul.mubr.bf16.gmra.mrb[0].mxu0 %v403
        %v622 = vpop.f32.mrb[0].mxu0
        %v623 = vadd.f32 0.0, %v622
        %v624 = vpop.f32.mrb[0].mxu0
        %v625 = vpop.f32.mrb[0].mxu0
        %v626 = vadd.f32 0.0, %v625
        %v627 = vpop.f32.mrb[0].mxu0
        %628 = vdwg.mxu0
        %v661 = vunpack.c.l.b16 %v224
        %v662 = vunpack.c.l.b16 %v225
        %v663 = vunpack.c.l.b16 %v226
        %v664 = vunpack.c.l.b16 %v227
        %v665 = vunpack.c.l.b16 %v228
        %v666 = vunpack.c.l.b16 %v229
        %v667 = vunpack.c.l.b16 %v230
        %v668 = vunpack.c.l.b16 %v231
        %v669 = vunpack.c.l.b16 %v232
        %v670 = vunpack.c.l.b16 %v233
        %v671 = vunpack.c.l.b16 %v234
        %v672 = vunpack.c.l.b16 %v235
        %v673 = vunpack.c.l.b16 %v236
        %v674 = vunpack.c.l.b16 %v237
        %v675 = vunpack.c.l.b16 %v238
        %v676 = vunpack.c.l.b16 %v239
        %v677 = vunpack.c.l.b16 %v240
        %v678 = vunpack.c.l.b16 %v241
        %v679 = vunpack.c.l.b16 %v242
        %v680 = vunpack.c.l.b16 %v243
        %v681 = vunpack.c.l.b16 %v244
        %v682 = vunpack.c.l.b16 %v245
        %v683 = vunpack.c.l.b16 %v246
        %v684 = vunpack.c.l.b16 %v247
        %v685 = vunpack.c.l.b16 %v248
        %v686 = vunpack.c.l.b16 %v249
        %v687 = vunpack.c.l.b16 %v250
        %v688 = vunpack.c.l.b16 %v251
        %v689 = vunpack.c.l.b16 %v252
        %v690 = vunpack.c.l.b16 %v253
        %v691 = vunpack.c.l.b16 %v254
        %v692 = vunpack.c.l.b16 %v255
        %v693 = vpack.c.b16 %v662, %v661
        %v694 = vpack.c.b16 %v664, %v663
        %v695 = vpack.c.b16 %v666, %v665
        %v696 = vpack.c.b16 %v668, %v667
        %v697 = vpack.c.b16 %v670, %v669
        %v698 = vpack.c.b16 %v672, %v671
        %v699 = vpack.c.b16 %v674, %v673
        %v700 = vpack.c.b16 %v676, %v675
        %v701 = vpack.c.b16 %v678, %v677
        %v702 = vpack.c.b16 %v680, %v679
        %v703 = vpack.c.b16 %v682, %v681
        %v704 = vpack.c.b16 %v684, %v683
        %v705 = vpack.c.b16 %v686, %v685
        %v706 = vpack.c.b16 %v688, %v687
        %v707 = vpack.c.b16 %v690, %v689
        %v708 = vpack.c.b16 %v692, %v691
        %v741 = vunpack.c.l.b16 %v256
        %v742 = vunpack.c.l.b16 %v257
        %v743 = vunpack.c.l.b16 %v258
        %v744 = vunpack.c.l.b16 %v259
        %v745 = vunpack.c.l.b16 %v260
        %v746 = vunpack.c.l.b16 %v261
        %v747 = vunpack.c.l.b16 %v262
        %v748 = vunpack.c.l.b16 %v263
        %v749 = vunpack.c.l.b16 %v264
        %v750 = vunpack.c.l.b16 %v265
        %v751 = vunpack.c.l.b16 %v266
        %v752 = vunpack.c.l.b16 %v267
        %v753 = vunpack.c.l.b16 %v268
        %v754 = vunpack.c.l.b16 %v269
        %v755 = vunpack.c.l.b16 %v270
        %v756 = vunpack.c.l.b16 %v271
        %v757 = vpack.c.b16 %v742, %v741
        %v758 = vpack.c.b16 %v744, %v743
        %v759 = vpack.c.b16 %v746, %v745
        %v760 = vpack.c.b16 %v748, %v747
        %v761 = vpack.c.b16 %v750, %v749
        %v762 = vpack.c.b16 %v752, %v751
        %v763 = vpack.c.b16 %v754, %v753
        %v764 = vpack.c.b16 %v756, %v755
        %773 = vmatprep.subr.bf16.mxu0 0
        %774 = vmatpush1.bf16.msra.mxu0 %v757
        %775 = vmatprep.subr.bf16.mxu0 0
        %776 = vmatpush1.bf16.msra.mxu0 %v758
        %777 = vmatprep.subr.bf16.mxu0 0
        %778 = vmatpush1.bf16.msra.mxu0 %v759
        %779 = vmatprep.subr.bf16.mxu0 0
        %780 = vmatpush1.bf16.msra.mxu0 %v760
        %781 = vmatprep.subr.bf16.mxu0 0
        %782 = vmatpush1.bf16.msra.mxu0 %v761
        %783 = vmatprep.subr.bf16.mxu0 0
        %784 = vmatpush1.bf16.msra.mxu0 %v762
        %785 = vmatprep.subr.bf16.mxu0 0
        %786 = vmatpush1.bf16.msra.mxu0 %v763
        %787 = vmatprep.subr.bf16.mxu0 0
        %788 = vmatpush1.bf16.msra.mxu0 %v764
        %789 = vmatprep.subr.bf16.mxu0 0
        %790 = vmatpush1.bf16.msra.mxu0 0
        %791 = vmatprep.subr.bf16.mxu0 0
        %792 = vmatpush1.bf16.msra.mxu0 0
        %793 = vmatprep.subr.bf16.mxu0 0
        %794 = vmatpush1.bf16.msra.mxu0 0
        %795 = vmatprep.subr.bf16.mxu0 0
        %796 = vmatpush1.bf16.msra.mxu0 0
        %797 = vmatprep.subr.bf16.mxu0 0
        %798 = vmatpush1.bf16.msra.mxu0 0
        %799 = vmatprep.subr.bf16.mxu0 0
        %800 = vmatpush1.bf16.msra.mxu0 0
        %801 = vmatprep.subr.bf16.mxu0 0
        %802 = vmatpush1.bf16.msra.mxu0 0
        %803 = vmatprep.subr.bf16.mxu0 0
        %804 = vmatpush1.bf16.msra.mxu0 0
        %805 = vmatprep.mubr.bf16.mxu0 0
        %806 = vmatmul.mubr.bf16.gmra.mrb[0].mxu0 %v693
        %v807 = vpop.f32.mrb[0].mxu0
        %v808 = vadd.f32 %v503, %v807
        %v809 = vpop.f32.mrb[0].mxu0
        %v810 = vpop.f32.mrb[0].mxu0
        %v811 = vadd.f32 %v506, %v810
        %v812 = vpop.f32.mrb[0].mxu0
        %813 = vmatprep.mubr.bf16.mxu0 0
        %814 = vmatmul.mubr.bf16.gmra.mrb[0].mxu0 %v694
        %v815 = vpop.f32.mrb[0].mxu0
        %v816 = vadd.f32 %v511, %v815
        %v817 = vpop.f32.mrb[0].mxu0
        %v818 = vpop.f32.mrb[0].mxu0
        %v819 = vadd.f32 %v514, %v818
        %v820 = vpop.f32.mrb[0].mxu0
        %821 = vmatprep.mubr.bf16.mxu0 0
        %822 = vmatmul.mubr.bf16.gmra.mrb[0].mxu0 %v695
        %v823 = vpop.f32.mrb[0].mxu0
        %v824 = vadd.f32 %v519, %v823
        %v825 = vpop.f32.mrb[0].mxu0
        %v826 = vpop.f32.mrb[0].mxu0
        %v827 = vadd.f32 %v522, %v826
        %v828 = vpop.f32.mrb[0].mxu0
        %829 = vmatprep.mubr.bf16.mxu0 0
        %830 = vmatmul.mubr.bf16.gmra.mrb[0].mxu0 %v696
        %v831 = vpop.f32.mrb[0].mxu0
        %v832 = vadd.f32 %v527, %v831
        %v833 = vpop.f32.mrb[0].mxu0
        %v834 = vpop.f32.mrb[0].mxu0
        %v835 = vadd.f32 %v530, %v834
        %v836 = vpop.f32.mrb[0].mxu0
        %837 = vmatprep.mubr.bf16.mxu0 0
        %838 = vmatmul.mubr.bf16.gmra.mrb[0].mxu0 %v697
        %v839 = vpop.f32.mrb[0].mxu0
        %v840 = vadd.f32 %v535, %v839
        %v841 = vpop.f32.mrb[0].mxu0
        %v842 = vpop.f32.mrb[0].mxu0
        %v843 = vadd.f32 %v538, %v842
        %v844 = vpop.f32.mrb[0].mxu0
        %845 = vmatprep.mubr.bf16.mxu0 0
        %846 = vmatmul.mubr.bf16.gmra.mrb[0].mxu0 %v698
        %v847 = vpop.f32.mrb[0].mxu0
        %v848 = vadd.f32 %v543, %v847
        %v849 = vpop.f32.mrb[0].mxu0
        %v850 = vpop.f32.mrb[0].mxu0
        %v851 = vadd.f32 %v546, %v850
        %v852 = vpop.f32.mrb[0].mxu0
        %853 = vmatprep.mubr.bf16.mxu0 0
        %854 = vmatmul.mubr.bf16.gmra.mrb[0].mxu0 %v699
        %v855 = vpop.f32.mrb[0].mxu0
        %v856 = vadd.f32 %v551, %v855
        %v857 = vpop.f32.mrb[0].mxu0
        %v858 = vpop.f32.mrb[0].mxu0
        %v859 = vadd.f32 %v554, %v858
        %v860 = vpop.f32.mrb[0].mxu0
        %861 = vmatprep.mubr.bf16.mxu0 0
        %862 = vmatmul.mubr.bf16.gmra.mrb[0].mxu0 %v700
        %v863 = vpop.f32.mrb[0].mxu0
        %v864 = vadd.f32 %v559, %v863
        %v865 = vpop.f32.mrb[0].mxu0
        %v866 = vpop.f32.mrb[0].mxu0
        %v867 = vadd.f32 %v562, %v866
        %v868 = vpop.f32.mrb[0].mxu0
        %869 = vmatprep.mubr.bf16.mxu0 0
        %870 = vmatmul.mubr.bf16.gmra.mrb[0].mxu0 %v701
        %v871 = vpop.f32.mrb[0].mxu0
        %v872 = vadd.f32 %v567, %v871
        %v873 = vpop.f32.mrb[0].mxu0
        %v874 = vpop.f32.mrb[0].mxu0
        %v875 = vadd.f32 %v570, %v874
        %v876 = vpop.f32.mrb[0].mxu0
        %877 = vmatprep.mubr.bf16.mxu0 0
        %878 = vmatmul.mubr.bf16.gmra.mrb[0].mxu0 %v702
        %v879 = vpop.f32.mrb[0].mxu0
        %v880 = vadd.f32 %v575, %v879
        %v881 = vpop.f32.mrb[0].mxu0
        %v882 = vpop.f32.mrb[0].mxu0
        %v883 = vadd.f32 %v578, %v882
        %v884 = vpop.f32.mrb[0].mxu0
        %885 = vmatprep.mubr.bf16.mxu0 0
        %886 = vmatmul.mubr.bf16.gmra.mrb[0].mxu0 %v703
        %v887 = vpop.f32.mrb[0].mxu0
        %v888 = vadd.f32 %v583, %v887
        %v889 = vpop.f32.mrb[0].mxu0
        %v890 = vpop.f32.mrb[0].mxu0
        %v891 = vadd.f32 %v586, %v890
        %v892 = vpop.f32.mrb[0].mxu0
        %893 = vmatprep.mubr.bf16.mxu0 0
        %894 = vmatmul.mubr.bf16.gmra.mrb[0].mxu0 %v704
        %v895 = vpop.f32.mrb[0].mxu0
        %v896 = vadd.f32 %v591, %v895
        %v897 = vpop.f32.mrb[0].mxu0
        %v898 = vpop.f32.mrb[0].mxu0
        %v899 = vadd.f32 %v594, %v898
        %v900 = vpop.f32.mrb[0].mxu0
        %901 = vmatprep.mubr.bf16.mxu0 0
        %902 = vmatmul.mubr.bf16.gmra.mrb[0].mxu0 %v705
        %v903 = vpop.f32.mrb[0].mxu0
        %v904 = vadd.f32 %v599, %v903
        %v905 = vpop.f32.mrb[0].mxu0
        %v906 = vpop.f32.mrb[0].mxu0
        %v907 = vadd.f32 %v602, %v906
        %v908 = vpop.f32.mrb[0].mxu0
        %909 = vmatprep.mubr.bf16.mxu0 0
        %910 = vmatmul.mubr.bf16.gmra.mrb[0].mxu0 %v706
        %v911 = vpop.f32.mrb[0].mxu0
        %v912 = vadd.f32 %v607, %v911
        %v913 = vpop.f32.mrb[0].mxu0
        %v914 = vpop.f32.mrb[0].mxu0
        %v915 = vadd.f32 %v610, %v914
        %v916 = vpop.f32.mrb[0].mxu0
        %917 = vmatprep.mubr.bf16.mxu0 0
        %918 = vmatmul.mubr.bf16.gmra.mrb[0].mxu0 %v707
        %v919 = vpop.f32.mrb[0].mxu0
        %v920 = vadd.f32 %v615, %v919
        %v921 = vpop.f32.mrb[0].mxu0
        %v922 = vpop.f32.mrb[0].mxu0
        %v923 = vadd.f32 %v618, %v922
        %v924 = vpop.f32.mrb[0].mxu0
        %925 = vmatprep.mubr.bf16.mxu0 0
        %926 = vmatmul.mubr.bf16.gmra.mrb[0].mxu0 %v708
        %v927 = vpop.f32.mrb[0].mxu0
        %v928 = vadd.f32 %v623, %v927
        %v929 = vpop.f32.mrb[0].mxu0
        %v930 = vpop.f32.mrb[0].mxu0
        %v931 = vadd.f32 %v626, %v930
        %v932 = vpop.f32.mrb[0].mxu0
        %933 = vdwg.mxu0
        %s934 = sadd.s32 %s220, 2
        %s935 = smul.u32 %s934, 2
        %s936 = smul.addr %s935, 4
        %s937 = scalar_lea.vmem %s191, %s936 [#allocation2]
        %v938 = vld [vmem:[%s937] sm:$0xf]
        %v939 = vld [vmem:[%s937 + $0x4] sm:$0xf]
        %v940 = vld [vmem:[%s937 + $0x8] sm:$0xf]
        %v941 = vld [vmem:[%s937 + $0xc] sm:$0xf]
        %v942 = vld [vmem:[%s937 + $0x10] sm:$0xf]
        %v943 = vld [vmem:[%s937 + $0x14] sm:$0xf]
        %v944 = vld [vmem:[%s937 + $0x18] sm:$0xf]
        %v945 = vld [vmem:[%s937 + $0x1c] sm:$0xf]
        %v946 = vld [vmem:[%s937 + $0x20] sm:$0xf]
        %v947 = vld [vmem:[%s937 + $0x24] sm:$0xf]
        %v948 = vld [vmem:[%s937 + $0x28] sm:$0xf]
        %v949 = vld [vmem:[%s937 + $0x2c] sm:$0xf]
        %v950 = vld [vmem:[%s937 + $0x30] sm:$0xf]
        %v951 = vld [vmem:[%s937 + $0x34] sm:$0xf]
        %v952 = vld [vmem:[%s937 + $0x38] sm:$0xf]
        %v953 = vld [vmem:[%s937 + $0x3c] sm:$0xf]
        %v954 = vld [vmem:[%s937 + $0x40] sm:$0xf]
        %v955 = vld [vmem:[%s937 + $0x44] sm:$0xf]
        %v956 = vld [vmem:[%s937 + $0x48] sm:$0xf]
        %v957 = vld [vmem:[%s937 + $0x4c] sm:$0xf]
        %v958 = vld [vmem:[%s937 + $0x50] sm:$0xf]
        %v959 = vld [vmem:[%s937 + $0x54] sm:$0xf]
        %v960 = vld [vmem:[%s937 + $0x58] sm:$0xf]
        %v961 = vld [vmem:[%s937 + $0x5c] sm:$0xf]
        %v962 = vld [vmem:[%s937 + $0x60] sm:$0xf]
        %v963 = vld [vmem:[%s937 + $0x64] sm:$0xf]
        %v964 = vld [vmem:[%s937 + $0x68] sm:$0xf]
        %v965 = vld [vmem:[%s937 + $0x6c] sm:$0xf]
        %v966 = vld [vmem:[%s937 + $0x70] sm:$0xf]
        %v967 = vld [vmem:[%s937 + $0x74] sm:$0xf]
        %v968 = vld [vmem:[%s937 + $0x78] sm:$0xf]
        %v969 = vld [vmem:[%s937 + $0x7c] sm:$0xf]
        %v970 = vld [vmem:[#allocation5 + $0x80] sm:$0xf]
        %v971 = vld [vmem:[#allocation5 + $0x84] sm:$0xf]
        %v972 = vld [vmem:[#allocation5 + $0x88] sm:$0xf]
        %v973 = vld [vmem:[#allocation5 + $0x8c] sm:$0xf]
        %v974 = vld [vmem:[#allocation5 + $0x90] sm:$0xf]
        %v975 = vld [vmem:[#allocation5 + $0x94] sm:$0xf]
        %v976 = vld [vmem:[#allocation5 + $0x98] sm:$0xf]
        %v977 = vld [vmem:[#allocation5 + $0x9c] sm:$0xf]
        %v978 = vld [vmem:[#allocation5 + $0xa0] sm:$0xf]
        %v979 = vld [vmem:[#allocation5 + $0xa4] sm:$0xf]
        %v980 = vld [vmem:[#allocation5 + $0xa8] sm:$0xf]
        %v981 = vld [vmem:[#allocation5 + $0xac] sm:$0xf]
        %v982 = vld [vmem:[#allocation5 + $0xb0] sm:$0xf]
        %v983 = vld [vmem:[#allocation5 + $0xb4] sm:$0xf]
        %v984 = vld [vmem:[#allocation5 + $0xb8] sm:$0xf]
        %v985 = vld [vmem:[#allocation5 + $0xbc] sm:$0xf]
        %v1018 = vunpack.c.l.b16 %v938
        %v1019 = vunpack.c.l.b16 %v939
        %v1020 = vunpack.c.l.b16 %v940
        %v1021 = vunpack.c.l.b16 %v941
        %v1022 = vunpack.c.l.b16 %v942
        %v1023 = vunpack.c.l.b16 %v943
        %v1024 = vunpack.c.l.b16 %v944
        %v1025 = vunpack.c.l.b16 %v945
        %v1026 = vunpack.c.l.b16 %v946
        %v1027 = vunpack.c.l.b16 %v947
        %v1028 = vunpack.c.l.b16 %v948
        %v1029 = vunpack.c.l.b16 %v949
        %v1030 = vunpack.c.l.b16 %v950
        %v1031 = vunpack.c.l.b16 %v951
        %v1032 = vunpack.c.l.b16 %v952
        %v1033 = vunpack.c.l.b16 %v953
        %v1034 = vunpack.c.l.b16 %v954
        %v1035 = vunpack.c.l.b16 %v955
        %v1036 = vunpack.c.l.b16 %v956
        %v1037 = vunpack.c.l.b16 %v957
        %v1038 = vunpack.c.l.b16 %v958
        %v1039 = vunpack.c.l.b16 %v959
        %v1040 = vunpack.c.l.b16 %v960
        %v1041 = vunpack.c.l.b16 %v961
        %v1042 = vunpack.c.l.b16 %v962
        %v1043 = vunpack.c.l.b16 %v963
        %v1044 = vunpack.c.l.b16 %v964
        %v1045 = vunpack.c.l.b16 %v965
        %v1046 = vunpack.c.l.b16 %v966
        %v1047 = vunpack.c.l.b16 %v967
        %v1048 = vunpack.c.l.b16 %v968
        %v1049 = vunpack.c.l.b16 %v969
        %v1050 = vpack.c.b16 %v1019, %v1018
        %v1051 = vpack.c.b16 %v1021, %v1020
        %v1052 = vpack.c.b16 %v1023, %v1022
        %v1053 = vpack.c.b16 %v1025, %v1024
        %v1054 = vpack.c.b16 %v1027, %v1026
        %v1055 = vpack.c.b16 %v1029, %v1028
        %v1056 = vpack.c.b16 %v1031, %v1030
        %v1057 = vpack.c.b16 %v1033, %v1032
        %v1058 = vpack.c.b16 %v1035, %v1034
        %v1059 = vpack.c.b16 %v1037, %v1036
        %v1060 = vpack.c.b16 %v1039, %v1038
        %v1061 = vpack.c.b16 %v1041, %v1040
        %v1062 = vpack.c.b16 %v1043, %v1042
        %v1063 = vpack.c.b16 %v1045, %v1044
        %v1064 = vpack.c.b16 %v1047, %v1046
        %v1065 = vpack.c.b16 %v1049, %v1048
        %v1098 = vunpack.c.l.b16 %v970
        %v1099 = vunpack.c.l.b16 %v971
        %v1100 = vunpack.c.l.b16 %v972
        %v1101 = vunpack.c.l.b16 %v973
        %v1102 = vunpack.c.l.b16 %v974
        %v1103 = vunpack.c.l.b16 %v975
        %v1104 = vunpack.c.l.b16 %v976
        %v1105 = vunpack.c.l.b16 %v977
        %v1106 = vunpack.c.l.b16 %v978
        %v1107 = vunpack.c.l.b16 %v979
        %v1108 = vunpack.c.l.b16 %v980
        %v1109 = vunpack.c.l.b16 %v981
        %v1110 = vunpack.c.l.b16 %v982
        %v1111 = vunpack.c.l.b16 %v983
        %v1112 = vunpack.c.l.b16 %v984
        %v1113 = vunpack.c.l.b16 %v985
        %v1114 = vpack.c.b16 %v1099, %v1098
        %v1115 = vpack.c.b16 %v1101, %v1100
        %v1116 = vpack.c.b16 %v1103, %v1102
        %v1117 = vpack.c.b16 %v1105, %v1104
        %v1118 = vpack.c.b16 %v1107, %v1106
        %v1119 = vpack.c.b16 %v1109, %v1108
        %v1120 = vpack.c.b16 %v1111, %v1110
        %v1121 = vpack.c.b16 %v1113, %v1112
        %1130 = vmatprep.subr.bf16.mxu0 0
        %1131 = vmatpush1.bf16.msra.mxu0 %v1114
        %1132 = vmatprep.subr.bf16.mxu0 0
        %1133 = vmatpush1.bf16.msra.mxu0 %v1115
        %1134 = vmatprep.subr.bf16.mxu0 0
        %1135 = vmatpush1.bf16.msra.mxu0 %v1116
        %1136 = vmatprep.subr.bf16.mxu0 0
        %1137 = vmatpush1.bf16.msra.mxu0 %v1117
        %1138 = vmatprep.subr.bf16.mxu0 0
        %1139 = vmatpush1.bf16.msra.mxu0 %v1118
        %1140 = vmatprep.subr.bf16.mxu0 0
        %1141 = vmatpush1.bf16.msra.mxu0 %v1119
        %1142 = vmatprep.subr.bf16.mxu0 0
        %1143 = vmatpush1.bf16.msra.mxu0 %v1120
        %1144 = vmatprep.subr.bf16.mxu0 0
        %1145 = vmatpush1.bf16.msra.mxu0 %v1121
        %1146 = vmatprep.subr.bf16.mxu0 0
        %1147 = vmatpush1.bf16.msra.mxu0 0
        %1148 = vmatprep.subr.bf16.mxu0 0
        %1149 = vmatpush1.bf16.msra.mxu0 0
        %1150 = vmatprep.subr.bf16.mxu0 0
        %1151 = vmatpush1.bf16.msra.mxu0 0
        %1152 = vmatprep.subr.bf16.mxu0 0
        %1153 = vmatpush1.bf16.msra.mxu0 0
        %1154 = vmatprep.subr.bf16.mxu0 0
        %1155 = vmatpush1.bf16.msra.mxu0 0
        %1156 = vmatprep.subr.bf16.mxu0 0
        %1157 = vmatpush1.bf16.msra.mxu0 0
        %1158 = vmatprep.subr.bf16.mxu0 0
        %1159 = vmatpush1.bf16.msra.mxu0 0
        %1160 = vmatprep.subr.bf16.mxu0 0
        %1161 = vmatpush1.bf16.msra.mxu0 0
        %1162 = vmatprep.mubr.bf16.mxu0 0
        %1163 = vmatmul.mubr.bf16.gmra.mrb[0].mxu0 %v1050
        %v1164 = vpop.f32.mrb[0].mxu0
        %v1165 = vadd.f32 0.0, %v1164
        %v1166 = vpop.f32.mrb[0].mxu0
        %v1167 = vpop.f32.mrb[0].mxu0
        %v1168 = vadd.f32 0.0, %v1167
        %v1169 = vpop.f32.mrb[0].mxu0
        %1170 = vmatprep.mubr.bf16.mxu0 0
        %1171 = vmatmul.mubr.bf16.gmra.mrb[0].mxu0 %v1051
        %v1172 = vpop.f32.mrb[0].mxu0
        %v1173 = vadd.f32 0.0, %v1172
        %v1174 = vpop.f32.mrb[0].mxu0
        %v1175 = vpop.f32.mrb[0].mxu0
        %v1176 = vadd.f32 0.0, %v1175
        %v1177 = vpop.f32.mrb[0].mxu0
        %1178 = vmatprep.mubr.bf16.mxu0 0
        %1179 = vmatmul.mubr.bf16.gmra.mrb[0].mxu0 %v1052
        %v1180 = vpop.f32.mrb[0].mxu0
        %v1181 = vadd.f32 0.0, %v1180
        %v1182 = vpop.f32.mrb[0].mxu0
        %v1183 = vpop.f32.mrb[0].mxu0
        %v1184 = vadd.f32 0.0, %v1183
        %v1185 = vpop.f32.mrb[0].mxu0
        %1186 = vmatprep.mubr.bf16.mxu0 0
        %1187 = vmatmul.mubr.bf16.gmra.mrb[0].mxu0 %v1053
        %v1188 = vpop.f32.mrb[0].mxu0
        %v1189 = vadd.f32 0.0, %v1188
        %v1190 = vpop.f32.mrb[0].mxu0
        %v1191 = vpop.f32.mrb[0].mxu0
        %v1192 = vadd.f32 0.0, %v1191
        %v1193 = vpop.f32.mrb[0].mxu0
        %1194 = vmatprep.mubr.bf16.mxu0 0
        %1195 = vmatmul.mubr.bf16.gmra.mrb[0].mxu0 %v1054
        %v1196 = vpop.f32.mrb[0].mxu0
        %v1197 = vadd.f32 0.0, %v1196
        %v1198 = vpop.f32.mrb[0].mxu0
        %v1199 = vpop.f32.mrb[0].mxu0
        %v1200 = vadd.f32 0.0, %v1199
        %v1201 = vpop.f32.mrb[0].mxu0
        %1202 = vmatprep.mubr.bf16.mxu0 0
        %1203 = vmatmul.mubr.bf16.gmra.mrb[0].mxu0 %v1055
        %v1204 = vpop.f32.mrb[0].mxu0
        %v1205 = vadd.f32 0.0, %v1204
        %v1206 = vpop.f32.mrb[0].mxu0
        %v1207 = vpop.f32.mrb[0].mxu0
        %v1208 = vadd.f32 0.0, %v1207
        %v1209 = vpop.f32.mrb[0].mxu0
        %1210 = vmatprep.mubr.bf16.mxu0 0
        %1211 = vmatmul.mubr.bf16.gmra.mrb[0].mxu0 %v1056
        %v1212 = vpop.f32.mrb[0].mxu0
        %v1213 = vadd.f32 0.0, %v1212
        %v1214 = vpop.f32.mrb[0].mxu0
        %v1215 = vpop.f32.mrb[0].mxu0
        %v1216 = vadd.f32 0.0, %v1215
        %v1217 = vpop.f32.mrb[0].mxu0
        %1218 = vmatprep.mubr.bf16.mxu0 0
        %1219 = vmatmul.mubr.bf16.gmra.mrb[0].mxu0 %v1057
        %v1220 = vpop.f32.mrb[0].mxu0
        %v1221 = vadd.f32 0.0, %v1220
        %v1222 = vpop.f32.mrb[0].mxu0
        %v1223 = vpop.f32.mrb[0].mxu0
        %v1224 = vadd.f32 0.0, %v1223
        %v1225 = vpop.f32.mrb[0].mxu0
        %1226 = vmatprep.mubr.bf16.mxu0 0
        %1227 = vmatmul.mubr.bf16.gmra.mrb[0].mxu0 %v1058
        %v1228 = vpop.f32.mrb[0].mxu0
        %v1229 = vadd.f32 0.0, %v1228
        %v1230 = vpop.f32.mrb[0].mxu0
        %v1231 = vpop.f32.mrb[0].mxu0
        %v1232 = vadd.f32 0.0, %v1231
        %v1233 = vpop.f32.mrb[0].mxu0
        %1234 = vmatprep.mubr.bf16.mxu0 0
        %1235 = vmatmul.mubr.bf16.gmra.mrb[0].mxu0 %v1059
        %v1236 = vpop.f32.mrb[0].mxu0
        %v1237 = vadd.f32 0.0, %v1236
        %v1238 = vpop.f32.mrb[0].mxu0
        %v1239 = vpop.f32.mrb[0].mxu0
        %v1240 = vadd.f32 0.0, %v1239
        %v1241 = vpop.f32.mrb[0].mxu0
        %1242 = vmatprep.mubr.bf16.mxu0 0
        %1243 = vmatmul.mubr.bf16.gmra.mrb[0].mxu0 %v1060
        %v1244 = vpop.f32.mrb[0].mxu0
        %v1245 = vadd.f32 0.0, %v1244
        %v1246 = vpop.f32.mrb[0].mxu0
        %v1247 = vpop.f32.mrb[0].mxu0
        %v1248 = vadd.f32 0.0, %v1247
        %v1249 = vpop.f32.mrb[0].mxu0
        %1250 = vmatprep.mubr.bf16.mxu0 0
        %1251 = vmatmul.mubr.bf16.gmra.mrb[0].mxu0 %v1061
        %v1252 = vpop.f32.mrb[0].mxu0
        %v1253 = vadd.f32 0.0, %v1252
        %v1254 = vpop.f32.mrb[0].mxu0
        %v1255 = vpop.f32.mrb[0].mxu0
        %v1256 = vadd.f32 0.0, %v1255
        %v1257 = vpop.f32.mrb[0].mxu0
        %1258 = vmatprep.mubr.bf16.mxu0 0
        %1259 = vmatmul.mubr.bf16.gmra.mrb[0].mxu0 %v1062
        %v1260 = vpop.f32.mrb[0].mxu0
        %v1261 = vadd.f32 0.0, %v1260
        %v1262 = vpop.f32.mrb[0].mxu0
        %v1263 = vpop.f32.mrb[0].mxu0
        %v1264 = vadd.f32 0.0, %v1263
        %v1265 = vpop.f32.mrb[0].mxu0
        %1266 = vmatprep.mubr.bf16.mxu0 0
        %1267 = vmatmul.mubr.bf16.gmra.mrb[0].mxu0 %v1063
        %v1268 = vpop.f32.mrb[0].mxu0
        %v1269 = vadd.f32 0.0, %v1268
        %v1270 = vpop.f32.mrb[0].mxu0
        %v1271 = vpop.f32.mrb[0].mxu0
        %v1272 = vadd.f32 0.0, %v1271
        %v1273 = vpop.f32.mrb[0].mxu0
        %1274 = vmatprep.mubr.bf16.mxu0 0
        %1275 = vmatmul.mubr.bf16.gmra.mrb[0].mxu0 %v1064
        %v1276 = vpop.f32.mrb[0].mxu0
        %v1277 = vadd.f32 0.0, %v1276
        %v1278 = vpop.f32.mrb[0].mxu0
        %v1279 = vpop.f32.mrb[0].mxu0
        %v1280 = vadd.f32 0.0, %v1279
        %v1281 = vpop.f32.mrb[0].mxu0
        %1282 = vmatprep.mubr.bf16.mxu0 0
        %1283 = vmatmul.mubr.bf16.gmra.mrb[0].mxu0 %v1065
        %v1284 = vpop.f32.mrb[0].mxu0
        %v1285 = vadd.f32 0.0, %v1284
        %v1286 = vpop.f32.mrb[0].mxu0
        %v1287 = vpop.f32.mrb[0].mxu0
        %v1288 = vadd.f32 0.0, %v1287
        %v1289 = vpop.f32.mrb[0].mxu0
        %1290 = vdwg.mxu0
        %v1291 = vadd.f32 %v808, %v1165
        %v1292 = vadd.f32 %v811, %v1168
        %v1293 = vadd.f32 %v816, %v1173
        %v1294 = vadd.f32 %v819, %v1176
        %v1295 = vadd.f32 %v824, %v1181
        %v1296 = vadd.f32 %v827, %v1184
        %v1297 = vadd.f32 %v832, %v1189
        %v1298 = vadd.f32 %v835, %v1192
        %v1299 = vadd.f32 %v840, %v1197
        %v1300 = vadd.f32 %v843, %v1200
        %v1301 = vadd.f32 %v848, %v1205
        %v1302 = vadd.f32 %v851, %v1208
        %v1303 = vadd.f32 %v856, %v1213
        %v1304 = vadd.f32 %v859, %v1216
        %v1305 = vadd.f32 %v864, %v1221
        %v1306 = vadd.f32 %v867, %v1224
        %v1307 = vadd.f32 %v872, %v1229
        %v1308 = vadd.f32 %v875, %v1232
        %v1309 = vadd.f32 %v880, %v1237
        %v1310 = vadd.f32 %v883, %v1240
        %v1311 = vadd.f32 %v888, %v1245
        %v1312 = vadd.f32 %v891, %v1248
        %v1313 = vadd.f32 %v896, %v1253
        %v1314 = vadd.f32 %v899, %v1256
        %v1315 = vadd.f32 %v904, %v1261
        %v1316 = vadd.f32 %v907, %v1264
        %v1317 = vadd.f32 %v912, %v1269
        %v1318 = vadd.f32 %v915, %v1272
        %v1319 = vadd.f32 %v920, %v1277
        %v1320 = vadd.f32 %v923, %v1280
        %v1321 = vadd.f32 %v928, %v1285
        %v1322 = vadd.f32 %v931, %v1288
        %v1323 = vld [vmem:[%s2] sm:$0x1]
        %v1325 = vlaneseq
        %v1326 = vshrl.u32 %v1325, 7
        %v1327 = vsub.s32 0, %v1326
        %v1328 = vrot.slane %v1323, %v1327
        %v1330 = vadd.f32 %v1291, %v1328
        %v1331 = vadd.f32 %v1292, %v1328
        %v1332 = vadd.f32 %v1293, %v1328
        %v1333 = vadd.f32 %v1294, %v1328
        %v1334 = vadd.f32 %v1295, %v1328
        %v1335 = vadd.f32 %v1296, %v1328
        %v1336 = vadd.f32 %v1297, %v1328
        %v1337 = vadd.f32 %v1298, %v1328
        %v1338 = vadd.f32 %v1299, %v1328
        %v1339 = vadd.f32 %v1300, %v1328
        %v1340 = vadd.f32 %v1301, %v1328
        %v1341 = vadd.f32 %v1302, %v1328
        %v1342 = vadd.f32 %v1303, %v1328
        %v1343 = vadd.f32 %v1304, %v1328
        %v1344 = vadd.f32 %v1305, %v1328
        %v1345 = vadd.f32 %v1306, %v1328
        %v1346 = vadd.f32 %v1307, %v1328
        %v1347 = vadd.f32 %v1308, %v1328
        %v1348 = vadd.f32 %v1309, %v1328
        %v1349 = vadd.f32 %v1310, %v1328
        %v1350 = vadd.f32 %v1311, %v1328
        %v1351 = vadd.f32 %v1312, %v1328
        %v1352 = vadd.f32 %v1313, %v1328
        %v1353 = vadd.f32 %v1314, %v1328
        %v1354 = vadd.f32 %v1315, %v1328
        %v1355 = vadd.f32 %v1316, %v1328
        %v1356 = vadd.f32 %v1317, %v1328
        %v1357 = vadd.f32 %v1318, %v1328
        %v1358 = vadd.f32 %v1319, %v1328
        %v1359 = vadd.f32 %v1320, %v1328
        %v1360 = vadd.f32 %v1321, %v1328
        %v1361 = vadd.f32 %v1322, %v1328
        %v1362 = vmax.f32 %v1330, 0.0
        %v1363 = vmax.f32 %v1331, 0.0
        %v1364 = vmax.f32 %v1332, 0.0
        %v1365 = vmax.f32 %v1333, 0.0
        %v1366 = vmax.f32 %v1334, 0.0
        %v1367 = vmax.f32 %v1335, 0.0
        %v1368 = vmax.f32 %v1336, 0.0
        %v1369 = vmax.f32 %v1337, 0.0
        %v1370 = vmax.f32 %v1338, 0.0
        %v1371 = vmax.f32 %v1339, 0.0
        %v1372 = vmax.f32 %v1340, 0.0
        %v1373 = vmax.f32 %v1341, 0.0
        %v1374 = vmax.f32 %v1342, 0.0
        %v1375 = vmax.f32 %v1343, 0.0
        %v1376 = vmax.f32 %v1344, 0.0
        %v1377 = vmax.f32 %v1345, 0.0
        %v1378 = vmax.f32 %v1346, 0.0
        %v1379 = vmax.f32 %v1347, 0.0
        %v1380 = vmax.f32 %v1348, 0.0
        %v1381 = vmax.f32 %v1349, 0.0
        %v1382 = vmax.f32 %v1350, 0.0
        %v1383 = vmax.f32 %v1351, 0.0
        %v1384 = vmax.f32 %v1352, 0.0
        %v1385 = vmax.f32 %v1353, 0.0
        %v1386 = vmax.f32 %v1354, 0.0
        %v1387 = vmax.f32 %v1355, 0.0
        %v1388 = vmax.f32 %v1356, 0.0
        %v1389 = vmax.f32 %v1357, 0.0
        %v1390 = vmax.f32 %v1358, 0.0
        %v1391 = vmax.f32 %v1359, 0.0
        %v1392 = vmax.f32 %v1360, 0.0
        %v1393 = vmax.f32 %v1361, 0.0
        %1394 = vst [vmem:[%s217] sm:$0xff] %v1362
        %1395 = vst [vmem:[%s217 + $0x8] sm:$0xff] %v1363
        %1396 = vst [vmem:[%s217 + $0x10] sm:$0xff] %v1364
        %1397 = vst [vmem:[%s217 + $0x18] sm:$0xff] %v1365
        %1398 = vst [vmem:[%s217 + $0x20] sm:$0xff] %v1366
        %1399 = vst [vmem:[%s217 + $0x28] sm:$0xff] %v1367
        %1400 = vst [vmem:[%s217 + $0x30] sm:$0xff] %v1368
        %1401 = vst [vmem:[%s217 + $0x38] sm:$0xff] %v1369
        %1402 = vst [vmem:[%s217 + $0x40] sm:$0xff] %v1370
        %1403 = vst [vmem:[%s217 + $0x48] sm:$0xff] %v1371
        %1404 = vst [vmem:[%s217 + $0x50] sm:$0xff] %v1372
        %1405 = vst [vmem:[%s217 + $0x58] sm:$0xff] %v1373
        %1406 = vst [vmem:[%s217 + $0x60] sm:$0xff] %v1374
        %1407 = vst [vmem:[%s217 + $0x68] sm:$0xff] %v1375
        %1408 = vst [vmem:[%s217 + $0x70] sm:$0xff] %v1376
        %1409 = vst [vmem:[%s217 + $0x78] sm:$0xff] %v1377
        %1410 = vst [vmem:[%s217 + $0x80] sm:$0xff] %v1378
        %1411 = vst [vmem:[%s217 + $0x88] sm:$0xff] %v1379
        %1412 = vst [vmem:[%s217 + $0x90] sm:$0xff] %v1380
        %1413 = vst [vmem:[%s217 + $0x98] sm:$0xff] %v1381
        %1414 = vst [vmem:[%s217 + $0xa0] sm:$0xff] %v1382
        %1415 = vst [vmem:[%s217 + $0xa8] sm:$0xff] %v1383
        %1416 = vst [vmem:[%s217 + $0xb0] sm:$0xff] %v1384
        %1417 = vst [vmem:[%s217 + $0xb8] sm:$0xff] %v1385
        %1418 = vst [vmem:[%s217 + $0xc0] sm:$0xff] %v1386
        %1419 = vst [vmem:[%s217 + $0xc8] sm:$0xff] %v1387
        %1420 = vst [vmem:[%s217 + $0xd0] sm:$0xff] %v1388
        %1421 = vst [vmem:[%s217 + $0xd8] sm:$0xff] %v1389
        %1422 = vst [vmem:[%s217 + $0xe0] sm:$0xff] %v1390
        %1423 = vst [vmem:[%s217 + $0xe8] sm:$0xff] %v1391
        %1424 = vst [vmem:[%s217 + $0xf0] sm:$0xff] %v1392
        %1425 = vst [vmem:[%s217 + $0xf8] sm:$0xff] %v1393
        %s1426 = sand.u32 %s111, 1
        %s1427 = scalar_lea.sflag [#allocation4], %s1426
        %s1428 = sand.u32 %s111, 1
        %s1429 = smul.addr %s1428, 256
        %s1430 = scalar_lea.vmem [#allocation7], %s1429
        // Predicated region
        $region41: #{tpu_custom_call.1} parent=31 // pred_check
          %p1431 = pneg %p121
        $region42: #{tpu_custom_call.1} parent=31 // pred_check_branch
          %1433 = sbr.rel (%p1431) target = $region44
        $region43: #{tpu_custom_call.1} parent=31 // pred_region
          %s1434 = smul.u32 32, %s26
          %s1436 = ssub.s32 4096, 4096
          %1437 = vsyncadd %s1427, %s1436
          %s1438 = smul.addr %s25, 32
          %s1439 = sadd.s32 %s1434, %s1438
          %s1440 = smul.addr %s1439, 128
          %s1441 = scalar_lea.hbm %s3, %s1440
          %s1442 = sshll.u32 %s1430, 4
          %s1443 = int_to_ptr.vmem [resolvable:$true] %s1442
          %1448 = dma.vmem_to_hbm [thread:$0]  %s1443, 4096, %s1441, %s1427, 128, 128, 8
        $region44: #{tpu_custom_call.1} parent=31 // pred_fallthru
          _
      $region32: #{tpu_custom_call.1} parent=5 // pred_fallthru
        _
      %p1449 = scmp.le.s32.totalorder 2, %s16
      // Predicated region
      $region45: #{tpu_custom_call.1} parent=5 // pred_check
        %p1450 = pneg %p1449
      $region46: #{tpu_custom_call.1} parent=5 // pred_check_branch
        %1452 = sbr.rel (%p1450) target = $region48
      $region47: #{tpu_custom_call.1} parent=5 // pred_region
        %s1453 = ssub.s32 %s16, 2
        // Predicated region
        $region49: #{tpu_custom_call.1} parent=47 // pred_check
          %p1454 = pneg %p127
        $region50: #{tpu_custom_call.1} parent=47 // pred_check_branch
          %1456 = sbr.rel (%p1454) target = $region52
        $region51: #{tpu_custom_call.1} parent=47 // pred_region
          %s1457 = sand.u32 %s112, 1
          %s1458 = scalar_lea.sflag [#allocation4], %s1457
          %s1459 = sand.u32 %s112, 1
          %s1460 = smul.addr %s1459, 256
          %s1461 = scalar_lea.vmem [#allocation7], %s1460
          %1462 = dma.done %s1458, 4096
        $region52: #{tpu_custom_call.1} parent=47 // pred_fallthru
          _
      $region48: #{tpu_custom_call.1} parent=5 // pred_fallthru
        _
    $region6: #{tpu_custom_call.1} parent=1 // loop_footer
      %s20 = sadd.s32 1, %s16
    $region7: #{tpu_custom_call.1} parent=1 // loop_footer_branch
      %15 = sbr.rel target = $region3
    $region8: #{tpu_custom_call.1} parent=1 // loop_exit
      _
    %1463 = vsyncpa [#allocation3], 1
    %s1464 = scalar_lea.sflag [#allocation3], 1
    %1465 = vsyncpa %s1464, 1
    %1466 = vsyncpa [#allocation6], 1
    %1467 = vsyncpa [#allocation4], 1
    %s1468 = scalar_lea.sflag [#allocation4], 1
    %1469 = vsyncpa %s1468, 1

</llo_original>
